<compile_context>
chip_gen: v5e
topology: v5e:2x2
jax: 0.10.0
libtpu: 0.0.40
codegen_flags: <defaults>
</compile_context>

<pallas_src>
import functools

import jax
import jax.numpy as jnp
from jax.experimental import pallas as pl
from jax.experimental.pallas import tpu as pltpu


# ----------------------------- helpers (glue) -----------------------------

def parse_phyloDistances(phyloDistances_string):
    return sorted(float(x) for x in phyloDistances_string.split(','))


def get_loss_name(phylo_distances, level):
    return str(phylo_distances[level]).replace('.', '') + 'distance'


CLASS_OUTPUT_NAME = 'class'          # CONSTANTS.DISENTANGLER_CLASS_OUTPUT
CLASS_TENSORS = {CLASS_OUTPUT_NAME}  # CONSTANTS.CLASS_TENSORS


def _round_up(x, m):
    return ((x + m - 1) // m) * m


# ----------------------------- Pallas kernel ------------------------------

def _make_phylo_ce_kernel(num_heads, class_head_idx, true_b, tile_b):
    """Fused mean-CE over all heads + accuracy (micro-F1) on the class head."""

    def kernel(labels_ref, *rest):
        head_refs = rest[:num_heads]
        loss_ref = rest[num_heads]        # (1, num_heads) f32, resident
        acc_ref = rest[num_heads + 1]     # (1, 1)         f32, resident

        pid = pl.program_id(0)
        last = pl.num_programs(0) - 1

        @pl.when(pid == 0)
        def _init():
            loss_ref[...] = jnp.zeros_like(loss_ref)
            acc_ref[...] = jnp.zeros_like(acc_ref)

        # Valid-row mask for the (possibly padded) last batch tile.
        row = jax.lax.broadcasted_iota(jnp.int32, (tile_b, 1), 0) + pid * tile_b
        row_valid = row < true_b                                     # (T, 1)

        labels_all = labels_ref[...]                                 # (T, NLEV)

        loss_sums = []
        for h in range(num_heads):
            logits = head_refs[h][...].astype(jnp.float32)           # (T, C_h)
            c_h = logits.shape[-1]
            labels_h = labels_all[:, h:h + 1]                        # (T, 1)
            col = jax.lax.broadcasted_iota(jnp.int32, (tile_b, c_h), 1)

            # Numerically-stable log-softmax cross entropy (sum over rows;
            # divided by the true batch size in the finalize step).
            m = jnp.max(logits, axis=-1, keepdims=True)              # (T, 1)
            lse = m + jnp.log(jnp.sum(jnp.exp(logits - m),
                                      axis=-1, keepdims=True))
            target = jnp.sum(jnp.where(col == labels_h, logits, 0.0),
                             axis=-1, keepdims=True)                 # (T, 1)
            per_ex = jnp.where(row_valid, lse - target, 0.0)
            loss_sums.append(jnp.sum(per_ex))

            if h == class_head_idx:
                # micro-F1 for single-label multiclass == accuracy; first-max
                # tie handling matches torch.argmax (compare in f32).
                is_max = logits >= m
                first_argmax = jnp.min(jnp.where(is_max, col, c_h),
                                       axis=-1, keepdims=True)
                correct = jnp.where(row_valid & (first_argmax == labels_h),
                                    1.0, 0.0)
                acc_ref[...] += jnp.sum(correct).reshape(1, 1)

        loss_ref[...] += jnp.stack(loss_sums).reshape(1, num_heads)

        @pl.when(pid == last)
        def _finalize():
            inv_b = jnp.float32(1.0 / true_b)
            loss_ref[...] = loss_ref[...] * inv_b
            acc_ref[...] = acc_ref[...] * inv_b

    return kernel


def phylo_ce_losses(head_logits, head_labels, class_head_idx=0, tile_b=None):
    """Mean cross-entropy for every head + accuracy for the class head.

    head_logits: list of (B, C_h) arrays (f32 or bf16).
    head_labels: list of (B,) integer arrays (one label vector per head).
    Returns (losses[num_heads] f32, class_accuracy scalar f32).
    """
    num_heads = len(head_logits)
    b = head_logits[0].shape[0]

    # Per-batch-row VMEM footprint (lane-padded to 128) across all heads + labels.
    row_bytes = sum(_round_up(l.shape[-1], 128) * l.dtype.itemsize
                    for l in head_logits)
    row_bytes += _round_up(num_heads, 128) * 4  # int32 labels block

    if tile_b is None:
        budget = 8 << 20                       # per buffer set; 2x-buffered <=16 MiB
        tile_b = max(8, min(1024, budget // max(row_bytes, 1)))
        tile_b = (tile_b // 8) * 8
    tile_b = min(tile_b, _round_up(b, 8))      # don't over-pad tiny batches

    b_pad = _round_up(b, tile_b)
    grid = (b_pad // tile_b,)

    labels2d = jnp.stack([lab.astype(jnp.int32) for lab in head_labels], axis=1)
    if b_pad != b:
        pad = b_pad - b
        head_logits = [jnp.pad(l, ((0, pad), (0, 0))) for l in head_logits]
        labels2d = jnp.pad(labels2d, ((0, pad), (0, 0)))

    in_specs = [pl.BlockSpec((tile_b, num_heads), lambda i: (i, 0))]
    for l in head_logits:
        in_specs.append(pl.BlockSpec((tile_b, l.shape[-1]), lambda i: (i, 0)))

    out_specs = (pl.BlockSpec((1, num_heads), lambda i: (0, 0)),
                 pl.BlockSpec((1, 1), lambda i: (0, 0)))
    out_shape = (jax.ShapeDtypeStruct((1, num_heads), jnp.float32),
                 jax.ShapeDtypeStruct((1, 1), jnp.float32))

    # Explicit scoped-VMEM limit: double-buffered inputs + resident outputs + margin.
    vmem_bytes = 2 * tile_b * row_bytes + (num_heads + 1) * 128 * 8 * 4 + (4 << 20)
    vmem_bytes = int(min(max(vmem_bytes, 16 << 20), 48 << 20))

    kernel = _make_phylo_ce_kernel(num_heads, class_head_idx, b, tile_b)
    losses, acc = pl.pallas_call(
        kernel,
        grid=grid,
        in_specs=in_specs,
        out_specs=out_specs,
        out_shape=out_shape,
        compiler_params=pltpu.CompilerParams(
            dimension_semantics=("arbitrary",),   # batch axis is a reduction
            vmem_limit_bytes=vmem_bytes),
    )(labels2d, *head_logits)
    return losses[0], acc[0, 0]


# ------------------------------ PhyloLoss ---------------------------------

class PhyloLossPallas:
    """JAX/Pallas re-implementation of PhyloLoss.forward.

    The phylogeny (Species_sibling_finder + mlb) reduces to integer lookup
    tables mapping species id -> ancestor-group id per phylo level.
    """

    def __init__(self, phyloDistances_string, num_species, groups_per_level,
                 phylo_weight=1.0, beta=1.0):
        self.phylo_distances = parse_phyloDistances(phyloDistances_string)
        assert len(groups_per_level) == len(self.phylo_distances)
        self.phylo_weight = float(phylo_weight)
        self.beta = float(beta)
        self.num_species = num_species
        self.classifier_output_sizes = list(groups_per_level) + [num_species]
        # TODO(synk): the real module derives these maps from a Newick
        # phylogeny; here they are deterministic synthetic contiguous groups.
        self.level_maps = {}
        for level, g in enumerate(groups_per_level):
            name = get_loss_name(self.phylo_distances, level)
            self.level_maps[name] = jnp.array(
                [i * g // num_species for i in range(num_species)],
                dtype=jnp.int32)

    def __call__(self, cumulative_loss, activations, labels):
        # Gather every head (class head first) so one fused kernel handles all.
        head_names = [CLASS_OUTPUT_NAME]
        head_logits = [activations[CLASS_OUTPUT_NAME]]
        head_labels = [labels]
        for loss_name, activation in activations.items():
            if loss_name in CLASS_TENSORS:
                continue
            head_names.append(loss_name)
            head_logits.append(activation)
            # species label -> phylo-group representative index (tiny gather)
            head_labels.append(jnp.take(self.level_maps[loss_name], labels))

        losses, class_f1 = phylo_ce_losses(head_logits, head_labels,
                                           class_head_idx=0)

        individual_losses = {'class_loss': losses[0]}
        for idx, name in enumerate(head_names[1:], start=1):
            individual_losses[name + '_loss'] = losses[idx]

        total_phylo_loss = jnp.sum(losses)
        total_phylo_loss = (total_phylo_loss * self.beta
                            + losses[0] * (1.0 - self.beta))

        losses_dict = {
            'individual_losses': individual_losses,
            'total_phylo_loss': total_phylo_loss,
            'cumulative_loss': cumulative_loss + self.phylo_weight * total_phylo_loss,
            'class_f1': class_f1,
        }
        return losses_dict


# -------------------------------- main -------------------------------------

if __name__ == "__main__":
    key = jax.random.PRNGKey(0)

    batch = 8
    num_species = 16
    groups_per_level = [2, 4, 8]                     # distances 0.25, 0.5, 0.75
    phylo_distances_string = "0.25,0.5,0.75"

    loss_mod = PhyloLossPallas(phylo_distances_string,
                               num_species=num_species,
                               groups_per_level=groups_per_level,
                               phylo_weight=0.5,
                               beta=1.0)

    k1, k2, k3, k4, k5 = jax.random.split(key, 5)
    activations = {
        CLASS_OUTPUT_NAME: jax.random.normal(k1, (batch, num_species), jnp.float32),
        get_loss_name(loss_mod.phylo_distances, 0):
            jax.random.normal(k2, (batch, groups_per_level[0]), jnp.float32),
        get_loss_name(loss_mod.phylo_distances, 1):
            jax.random.normal(k3, (batch, groups_per_level[1]), jnp.float32),
        get_loss_name(loss_mod.phylo_distances, 2):
            jax.random.normal(k4, (batch, groups_per_level[2]), jnp.float32),
    }
    labels = jax.random.randint(k5, (batch,), 0, num_species, dtype=jnp.int32)
    cumulative_loss = jnp.float32(0.123)

    out = loss_mod(cumulative_loss, activations, labels)
    jax.block_until_ready(out)
    print("KERNEL_OK")
</pallas_src>

<mosaic_0001>
module attributes {stable_mosaic.version = 11 : i64} {
  func.func @kernel(%arg0: i32, %arg1: memref<8x4xi32, #tpu.memory_space<vmem>>, %arg2: memref<8x16xf32, #tpu.memory_space<vmem>>, %arg3: memref<8x2xf32, #tpu.memory_space<vmem>>, %arg4: memref<8x4xf32, #tpu.memory_space<vmem>>, %arg5: memref<8x8xf32, #tpu.memory_space<vmem>>, %arg6: memref<1x4xf32, #tpu.memory_space<vmem>>, %arg7: memref<1x1xf32, #tpu.memory_space<vmem>>) attributes {dimension_semantics = [#tpu.dimension_semantics<arbitrary>], iteration_bounds = array<i64: 1>, scalar_prefetch = 0 : i64, scratch_operands = 0 : i64, tpu.core_type = #tpu.core_type<tc>, window_params = [{transform_indices = @transform_0, window_bounds = array<i64: 8, 4>}, {transform_indices = @transform_1, window_bounds = array<i64: 8, 16>}, {transform_indices = @transform_2, window_bounds = array<i64: 8, 2>}, {transform_indices = @transform_3, window_bounds = array<i64: 8, 4>}, {transform_indices = @transform_4, window_bounds = array<i64: 8, 8>}, {pipeline_mode = #tpu.pipeline_mode<synchronous>, transform_indices = @transform_5, window_bounds = array<i64: 1, 4>}, {pipeline_mode = #tpu.pipeline_mode<synchronous>, transform_indices = @transform_6, window_bounds = array<i64: 1, 1>}]} {
    %c0_i32 = arith.constant 0 : i32
    %0 = arith.cmpi eq, %arg0, %c0_i32 : i32
    %1 = arith.extui %0 : i1 to i32
    %c0_i32_0 = arith.constant 0 : i32
    %2 = arith.cmpi ne, %1, %c0_i32_0 : i32
    scf.if %2 {
      %cst_48 = arith.constant 0.000000e+00 : f32
      %141 = vector.broadcast %cst_48 : f32 to vector<1x4xf32>
      %c0_49 = arith.constant 0 : index
      %c0_50 = arith.constant 0 : index
      %142 = vector.load %arg6[%c0_49, %c0_50] : memref<1x4xf32, #tpu.memory_space<vmem>>, vector<1x4xf32>
      tpu.vector_store %arg6[%c0_49, %c0_50], %141 {strides = array<i32>} : memref<1x4xf32, #tpu.memory_space<vmem>>, vector<1x4xf32>,
      %cst_51 = arith.constant 0.000000e+00 : f32
      %143 = vector.broadcast %cst_51 : f32 to vector<1x1xf32>
      %c0_52 = arith.constant 0 : index
      %c0_53 = arith.constant 0 : index
      %144 = vector.load %arg7[%c0_52, %c0_53] : memref<1x1xf32, #tpu.memory_space<vmem>>, vector<1x1xf32>
      tpu.vector_store %arg7[%c0_52, %c0_53], %143 {strides = array<i32>} : memref<1x1xf32, #tpu.memory_space<vmem>>, vector<1x1xf32>,
    } else {
    }
    %3 = tpu.iota {dimensions = array<i32: 0>} : vector<8x1xi32>
    %c8_i32 = arith.constant 8 : i32
    %4 = arith.muli %arg0, %c8_i32 : i32
    %5 = vector.broadcast %4 : i32 to vector<8x1xi32>
    %6 = arith.addi %3, %5 : vector<8x1xi32>
    %c8_i32_1 = arith.constant 8 : i32
    %7 = vector.broadcast %c8_i32_1 : i32 to vector<8x1xi32>
    %8 = arith.cmpi slt, %6, %7 : vector<8x1xi32>
    %c0 = arith.constant 0 : index
    %c0_2 = arith.constant 0 : index
    %9 = vector.load %arg1[%c0, %c0_2] : memref<8x4xi32, #tpu.memory_space<vmem>>, vector<8x4xi32>
    %c0_3 = arith.constant 0 : index
    %c0_4 = arith.constant 0 : index
    %10 = vector.load %arg2[%c0_3, %c0_4] : memref<8x16xf32, #tpu.memory_space<vmem>>, vector<8x16xf32>
    %11 = vector.extract_strided_slice %9 {offsets = [0, 0], sizes = [8, 1], strides = [1, 1]} : vector<8x4xi32> to vector<8x1xi32>
    %12 = tpu.iota {dimensions = array<i32: 1>} : vector<8x16xi32>
    %cst = arith.constant dense<0xFF800000> : vector<8xf32>
    %13 = vector.multi_reduction <maximumf>, %10, %cst [1] : vector<8x16xf32> to vector<8xf32>
    %14 = vector.shape_cast %13 : vector<8xf32> to vector<8x1xf32>
    %15 = vector.broadcast %14 : vector<8x1xf32> to vector<8x16xf32>
    %16 = arith.subf %10, %15 : vector<8x16xf32>
    %17 = math.exp %16 : vector<8x16xf32>
    %cst_5 = arith.constant dense<0.000000e+00> : vector<8xf32>
    %18 = vector.multi_reduction <add>, %17, %cst_5 [1] : vector<8x16xf32> to vector<8xf32>
    %19 = vector.shape_cast %18 : vector<8xf32> to vector<8x1xf32>
    %20 = math.log %19 : vector<8x1xf32>
    %21 = arith.addf %14, %20 : vector<8x1xf32>
    %22 = vector.broadcast %11 : vector<8x1xi32> to vector<8x16xi32>
    %23 = arith.cmpi eq, %12, %22 : vector<8x16xi32>
    %cst_6 = arith.constant 0.000000e+00 : f32
    %24 = vector.broadcast %cst_6 : f32 to vector<8x16xf32>
    %25 = arith.select %23, %10, %24 : vector<8x16xi1>, vector<8x16xf32>
    %cst_7 = arith.constant dense<0.000000e+00> : vector<8xf32>
    %26 = vector.multi_reduction <add>, %25, %cst_7 [1] : vector<8x16xf32> to vector<8xf32>
    %27 = vector.shape_cast %26 : vector<8xf32> to vector<8x1xf32>
    %28 = arith.subf %21, %27 : vector<8x1xf32>
    %cst_8 = arith.constant 0.000000e+00 : f32
    %29 = vector.broadcast %cst_8 : f32 to vector<8x1xf32>
    %30 = arith.select %8, %28, %29 : vector<8x1xi1>, vector<8x1xf32>
    %31 = vector.shape_cast %30 : vector<8x1xf32> to vector<1x8x1xf32>
    %cst_9 = arith.constant dense<0.000000e+00> : vector<1xf32>
    %32 = vector.multi_reduction <add>, %31, %cst_9 [1, 2] : vector<1x8x1xf32> to vector<1xf32>
    %33 = vector.shape_cast %32 : vector<1xf32> to vector<1x1x1xf32>
    %34 = vector.extract %33[0, 0, 0] : f32 from vector<1x1x1xf32>
    %35 = vector.broadcast %14 : vector<8x1xf32> to vector<8x16xf32>
    %36 = arith.cmpf oge, %10, %35 : vector<8x16xf32>
    %c16_i32 = arith.constant 16 : i32
    %37 = vector.broadcast %c16_i32 : i32 to vector<8x16xi32>
    %38 = arith.select %36, %12, %37 : vector<8x16xi1>, vector<8x16xi32>
    %cst_10 = arith.constant dense<2147483647> : vector<8xi32>
    %39 = vector.multi_reduction <minsi>, %38, %cst_10 [1] : vector<8x16xi32> to vector<8xi32>
    %40 = vector.shape_cast %39 : vector<8xi32> to vector<8x1xi32>
    %41 = arith.cmpi eq, %40, %11 : vector<8x1xi32>
    %42 = arith.andi %8, %41 : vector<8x1xi1>
    %cst_11 = arith.constant 1.000000e+00 : f32
    %cst_12 = arith.constant 0.000000e+00 : f32
    %43 = vector.broadcast %cst_11 : f32 to vector<8x1xf32>
    %44 = vector.broadcast %cst_12 : f32 to vector<8x1xf32>
    %45 = arith.select %42, %43, %44 : vector<8x1xi1>, vector<8x1xf32>
    %c0_13 = arith.constant 0 : index
    %c0_14 = arith.constant 0 : index
    %46 = vector.load %arg7[%c0_13, %c0_14] : memref<1x1xf32, #tpu.memory_space<vmem>>, vector<1x1xf32>
    %47 = vector.shape_cast %45 : vector<8x1xf32> to vector<1x8x1xf32>
    %cst_15 = arith.constant dense<0.000000e+00> : vector<1xf32>
    %48 = vector.multi_reduction <add>, %47, %cst_15 [1, 2] : vector<1x8x1xf32> to vector<1xf32>
    %49 = vector.shape_cast %48 : vector<1xf32> to vector<1x1x1xf32>
    %50 = vector.extract %49[0, 0, 0] : f32 from vector<1x1x1xf32>
    %51 = vector.broadcast %50 : f32 to vector<1x1xf32>
    %52 = arith.addf %46, %51 : vector<1x1xf32>
    %c0_16 = arith.constant 0 : index
    %c0_17 = arith.constant 0 : index
    %53 = vector.load %arg7[%c0_16, %c0_17] : memref<1x1xf32, #tpu.memory_space<vmem>>, vector<1x1xf32>
    tpu.vector_store %arg7[%c0_16, %c0_17], %52 {strides = array<i32>} : memref<1x1xf32, #tpu.memory_space<vmem>>, vector<1x1xf32>,
    %c0_18 = arith.constant 0 : index
    %c0_19 = arith.constant 0 : index
    %54 = vector.load %arg3[%c0_18, %c0_19] : memref<8x2xf32, #tpu.memory_space<vmem>>, vector<8x2xf32>
    %55 = vector.extract_strided_slice %9 {offsets = [0, 1], sizes = [8, 1], strides = [1, 1]} : vector<8x4xi32> to vector<8x1xi32>
    %56 = tpu.iota {dimensions = array<i32: 1>} : vector<8x2xi32>
    %cst_20 = arith.constant dense<0xFF800000> : vector<8xf32>
    %57 = vector.multi_reduction <maximumf>, %54, %cst_20 [1] : vector<8x2xf32> to vector<8xf32>
    %58 = vector.shape_cast %57 : vector<8xf32> to vector<8x1xf32>
    %59 = vector.broadcast %58 : vector<8x1xf32> to vector<8x2xf32>
    %60 = arith.subf %54, %59 : vector<8x2xf32>
    %61 = math.exp %60 : vector<8x2xf32>
    %cst_21 = arith.constant dense<0.000000e+00> : vector<8xf32>
    %62 = vector.multi_reduction <add>, %61, %cst_21 [1] : vector<8x2xf32> to vector<8xf32>
    %63 = vector.shape_cast %62 : vector<8xf32> to vector<8x1xf32>
    %64 = math.log %63 : vector<8x1xf32>
    %65 = arith.addf %58, %64 : vector<8x1xf32>
    %66 = vector.broadcast %55 : vector<8x1xi32> to vector<8x2xi32>
    %67 = arith.cmpi eq, %56, %66 : vector<8x2xi32>
    %cst_22 = arith.constant 0.000000e+00 : f32
    %68 = vector.broadcast %cst_22 : f32 to vector<8x2xf32>
    %69 = arith.select %67, %54, %68 : vector<8x2xi1>, vector<8x2xf32>
    %cst_23 = arith.constant dense<0.000000e+00> : vector<8xf32>
    %70 = vector.multi_reduction <add>, %69, %cst_23 [1] : vector<8x2xf32> to vector<8xf32>
    %71 = vector.shape_cast %70 : vector<8xf32> to vector<8x1xf32>
    %72 = arith.subf %65, %71 : vector<8x1xf32>
    %cst_24 = arith.constant 0.000000e+00 : f32
    %73 = vector.broadcast %cst_24 : f32 to vector<8x1xf32>
    %74 = arith.select %8, %72, %73 : vector<8x1xi1>, vector<8x1xf32>
    %75 = vector.shape_cast %74 : vector<8x1xf32> to vector<1x8x1xf32>
    %cst_25 = arith.constant dense<0.000000e+00> : vector<1xf32>
    %76 = vector.multi_reduction <add>, %75, %cst_25 [1, 2] : vector<1x8x1xf32> to vector<1xf32>
    %77 = vector.shape_cast %76 : vector<1xf32> to vector<1x1x1xf32>
    %78 = vector.extract %77[0, 0, 0] : f32 from vector<1x1x1xf32>
    %c0_26 = arith.constant 0 : index
    %c0_27 = arith.constant 0 : index
    %79 = vector.load %arg4[%c0_26, %c0_27] : memref<8x4xf32, #tpu.memory_space<vmem>>, vector<8x4xf32>
    %80 = vector.extract_strided_slice %9 {offsets = [0, 2], sizes = [8, 1], strides = [1, 1]} : vector<8x4xi32> to vector<8x1xi32>
    %81 = tpu.iota {dimensions = array<i32: 1>} : vector<8x4xi32>
    %cst_28 = arith.constant dense<0xFF800000> : vector<8xf32>
    %82 = vector.multi_reduction <maximumf>, %79, %cst_28 [1] : vector<8x4xf32> to vector<8xf32>
    %83 = vector.shape_cast %82 : vector<8xf32> to vector<8x1xf32>
    %84 = vector.broadcast %83 : vector<8x1xf32> to vector<8x4xf32>
    %85 = arith.subf %79, %84 : vector<8x4xf32>
    %86 = math.exp %85 : vector<8x4xf32>
    %cst_29 = arith.constant dense<0.000000e+00> : vector<8xf32>
    %87 = vector.multi_reduction <add>, %86, %cst_29 [1] : vector<8x4xf32> to vector<8xf32>
    %88 = vector.shape_cast %87 : vector<8xf32> to vector<8x1xf32>
    %89 = math.log %88 : vector<8x1xf32>
    %90 = arith.addf %83, %89 : vector<8x1xf32>
    %91 = vector.broadcast %80 : vector<8x1xi32> to vector<8x4xi32>
    %92 = arith.cmpi eq, %81, %91 : vector<8x4xi32>
    %cst_30 = arith.constant 0.000000e+00 : f32
    %93 = vector.broadcast %cst_30 : f32 to vector<8x4xf32>
    %94 = arith.select %92, %79, %93 : vector<8x4xi1>, vector<8x4xf32>
    %cst_31 = arith.constant dense<0.000000e+00> : vector<8xf32>
    %95 = vector.multi_reduction <add>, %94, %cst_31 [1] : vector<8x4xf32> to vector<8xf32>
    %96 = vector.shape_cast %95 : vector<8xf32> to vector<8x1xf32>
    %97 = arith.subf %90, %96 : vector<8x1xf32>
    %cst_32 = arith.constant 0.000000e+00 : f32
    %98 = vector.broadcast %cst_32 : f32 to vector<8x1xf32>
    %99 = arith.select %8, %97, %98 : vector<8x1xi1>, vector<8x1xf32>
    %100 = vector.shape_cast %99 : vector<8x1xf32> to vector<1x8x1xf32>
    %cst_33 = arith.constant dense<0.000000e+00> : vector<1xf32>
    %101 = vector.multi_reduction <add>, %100, %cst_33 [1, 2] : vector<1x8x1xf32> to vector<1xf32>
    %102 = vector.shape_cast %101 : vector<1xf32> to vector<1x1x1xf32>
    %103 = vector.extract %102[0, 0, 0] : f32 from vector<1x1x1xf32>
    %c0_34 = arith.constant 0 : index
    %c0_35 = arith.constant 0 : index
    %104 = vector.load %arg5[%c0_34, %c0_35] : memref<8x8xf32, #tpu.memory_space<vmem>>, vector<8x8xf32>
    %105 = vector.extract_strided_slice %9 {offsets = [0, 3], sizes = [8, 1], strides = [1, 1]} : vector<8x4xi32> to vector<8x1xi32>
    %106 = tpu.iota {dimensions = array<i32: 1>} : vector<8x8xi32>
    %cst_36 = arith.constant dense<0xFF800000> : vector<8xf32>
    %107 = vector.multi_reduction <maximumf>, %104, %cst_36 [1] : vector<8x8xf32> to vector<8xf32>
    %108 = vector.shape_cast %107 : vector<8xf32> to vector<8x1xf32>
    %109 = vector.broadcast %108 : vector<8x1xf32> to vector<8x8xf32>
    %110 = arith.subf %104, %109 : vector<8x8xf32>
    %111 = math.exp %110 : vector<8x8xf32>
    %cst_37 = arith.constant dense<0.000000e+00> : vector<8xf32>
    %112 = vector.multi_reduction <add>, %111, %cst_37 [1] : vector<8x8xf32> to vector<8xf32>
    %113 = vector.shape_cast %112 : vector<8xf32> to vector<8x1xf32>
    %114 = math.log %113 : vector<8x1xf32>
    %115 = arith.addf %108, %114 : vector<8x1xf32>
    %116 = vector.broadcast %105 : vector<8x1xi32> to vector<8x8xi32>
    %117 = arith.cmpi eq, %106, %116 : vector<8x8xi32>
    %cst_38 = arith.constant 0.000000e+00 : f32
    %118 = vector.broadcast %cst_38 : f32 to vector<8x8xf32>
    %119 = arith.select %117, %104, %118 : vector<8x8xi1>, vector<8x8xf32>
    %cst_39 = arith.constant dense<0.000000e+00> : vector<8xf32>
    %120 = vector.multi_reduction <add>, %119, %cst_39 [1] : vector<8x8xf32> to vector<8xf32>
    %121 = vector.shape_cast %120 : vector<8xf32> to vector<8x1xf32>
    %122 = arith.subf %115, %121 : vector<8x1xf32>
    %cst_40 = arith.constant 0.000000e+00 : f32
    %123 = vector.broadcast %cst_40 : f32 to vector<8x1xf32>
    %124 = arith.select %8, %122, %123 : vector<8x1xi1>, vector<8x1xf32>
    %125 = vector.shape_cast %124 : vector<8x1xf32> to vector<1x8x1xf32>
    %cst_41 = arith.constant dense<0.000000e+00> : vector<1xf32>
    %126 = vector.multi_reduction <add>, %125, %cst_41 [1, 2] : vector<1x8x1xf32> to vector<1xf32>
    %127 = vector.shape_cast %126 : vector<1xf32> to vector<1x1x1xf32>
    %128 = vector.extract %127[0, 0, 0] : f32 from vector<1x1x1xf32>
    %c0_42 = arith.constant 0 : index
    %c0_43 = arith.constant 0 : index
    %129 = vector.load %arg6[%c0_42, %c0_43] : memref<1x4xf32, #tpu.memory_space<vmem>>, vector<1x4xf32>
    %130 = vector.broadcast %34 : f32 to vector<1xf32>
    %131 = vector.broadcast %78 : f32 to vector<1xf32>
    %132 = vector.broadcast %103 : f32 to vector<1xf32>
    %133 = vector.broadcast %128 : f32 to vector<1xf32>
    %134 = tpu.concatenate %130, %131, %132, %133 in 0 : vector<1xf32>, vector<1xf32>, vector<1xf32>, vector<1xf32> -> vector<4xf32>
    %135 = vector.shape_cast %134 : vector<4xf32> to vector<1x4xf32>
    %136 = arith.addf %129, %135 : vector<1x4xf32>
    %c0_44 = arith.constant 0 : index
    %c0_45 = arith.constant 0 : index
    %137 = vector.load %arg6[%c0_44, %c0_45] : memref<1x4xf32, #tpu.memory_space<vmem>>, vector<1x4xf32>
    tpu.vector_store %arg6[%c0_44, %c0_45], %136 {strides = array<i32>} : memref<1x4xf32, #tpu.memory_space<vmem>>, vector<1x4xf32>,
    %c0_i32_46 = arith.constant 0 : i32
    %138 = arith.cmpi eq, %arg0, %c0_i32_46 : i32
    %139 = arith.extui %138 : i1 to i32
    %c0_i32_47 = arith.constant 0 : i32
    %140 = arith.cmpi ne, %139, %c0_i32_47 : i32
    scf.if %140 {
      %c0_48 = arith.constant 0 : index
      %c0_49 = arith.constant 0 : index
      %141 = vector.load %arg6[%c0_48, %c0_49] : memref<1x4xf32, #tpu.memory_space<vmem>>, vector<1x4xf32>
      %cst_50 = arith.constant 1.250000e-01 : f32
      %142 = vector.broadcast %cst_50 : f32 to vector<1x4xf32>
      %143 = arith.mulf %141, %142 : vector<1x4xf32>
      %c0_51 = arith.constant 0 : index
      %c0_52 = arith.constant 0 : index
      %144 = vector.load %arg6[%c0_51, %c0_52] : memref<1x4xf32, #tpu.memory_space<vmem>>, vector<1x4xf32>
      tpu.vector_store %arg6[%c0_51, %c0_52], %143 {strides = array<i32>} : memref<1x4xf32, #tpu.memory_space<vmem>>, vector<1x4xf32>,
      %c0_53 = arith.constant 0 : index
      %c0_54 = arith.constant 0 : index
      %145 = vector.load %arg7[%c0_53, %c0_54] : memref<1x1xf32, #tpu.memory_space<vmem>>, vector<1x1xf32>
      %cst_55 = arith.constant 1.250000e-01 : f32
      %146 = vector.broadcast %cst_55 : f32 to vector<1x1xf32>
      %147 = arith.mulf %145, %146 : vector<1x1xf32>
      %c0_56 = arith.constant 0 : index
      %c0_57 = arith.constant 0 : index
      %148 = vector.load %arg7[%c0_56, %c0_57] : memref<1x1xf32, #tpu.memory_space<vmem>>, vector<1x1xf32>
      tpu.vector_store %arg7[%c0_56, %c0_57], %147 {strides = array<i32>} : memref<1x1xf32, #tpu.memory_space<vmem>>, vector<1x1xf32>,
    } else {
    }
    return
  }
  func.func @transform_0(%arg0: i32) -> (i32, i32) {
    %c0_i32 = arith.constant 0 : i32
    %c0_i32_0 = arith.constant 0 : i32
    return %arg0, %c0_i32 : i32, i32
  }
  func.func @transform_1(%arg0: i32) -> (i32, i32) {
    %c0_i32 = arith.constant 0 : i32
    %c0_i32_0 = arith.constant 0 : i32
    return %arg0, %c0_i32 : i32, i32
  }
  func.func @transform_2(%arg0: i32) -> (i32, i32) {
    %c0_i32 = arith.constant 0 : i32
    %c0_i32_0 = arith.constant 0 : i32
    return %arg0, %c0_i32 : i32, i32
  }
  func.func @transform_3(%arg0: i32) -> (i32, i32) {
    %c0_i32 = arith.constant 0 : i32
    %c0_i32_0 = arith.constant 0 : i32
    return %arg0, %c0_i32 : i32, i32
  }
  func.func @transform_4(%arg0: i32) -> (i32, i32) {
    %c0_i32 = arith.constant 0 : i32
    %c0_i32_0 = arith.constant 0 : i32
    return %arg0, %c0_i32 : i32, i32
  }
  func.func @transform_5(%arg0: i32) -> (i32, i32) {
    %c0_i32 = arith.constant 0 : i32
    %c0_i32_0 = arith.constant 0 : i32
    %c0_i32_1 = arith.constant 0 : i32
    return %c0_i32, %c0_i32_0 : i32, i32
  }
  func.func @transform_6(%arg0: i32) -> (i32, i32) {
    %c0_i32 = arith.constant 0 : i32
    %c0_i32_0 = arith.constant 0 : i32
    %c0_i32_1 = arith.constant 0 : i32
    return %c0_i32, %c0_i32_0 : i32, i32
  }
}

</mosaic_0001>

<llo_original>
// kernel: tpu_custom_call.1
$region0: #{tpu_custom_call.1}
  #allocation0 [shape = 'u32[]', space=smem, size = 0x4, offset = 0x4, fixed_abs, tag = 'smem constant byte address 0x4 - core index']
  #allocation1 [shape = 'u32[72,128]{1,0:T(1,128)}', space=vmem, size = 0x9000, scoped, tag = 'internal scratch']
  %s0 = inlined_call_operand.vmem [shape: s32[8,4], index: 0, kind: input, shape index: {}]
  %s1 = inlined_call_operand.vmem [shape: f32[8,16], index: 1, kind: input, shape index: {}]
  %s2 = inlined_call_operand.vmem [shape: f32[8,2], index: 2, kind: input, shape index: {}]
  %s3 = inlined_call_operand.vmem [shape: f32[8,4], index: 3, kind: input, shape index: {}]
  %s4 = inlined_call_operand.vmem [shape: f32[8,8], index: 4, kind: input, shape index: {}]
  %s5 = inlined_call_operand.hbm [shape: f32[1,4], index: 5, kind: output, shape index: {0}]
  %s6 = inlined_call_operand.hbm [shape: f32[1,1], index: 6, kind: output, shape index: {1}]
  %7 = xla_tuple %s5, %s6
  %s8 = sld [smem:[#allocation0]]
  $region46: #{tpu_custom_call.1} parent=0
    _
  %s10 = ssub.s32 1, %s8
  %s11 = scalar_select 0, %s10, %s8
  $region1: #{tpu_custom_call.1} parent=0
    #allocation2 [shape = 'u8[512]{0}', space=vmem, size = 0x400, scoped, tag = 'output window, operand 0, single buffered']
    #allocation3 [shape = 's32[1]{0}', space=sflag, size = 0x4, scoped, tag = 'scoped memory for tpu_custom_call.1']
    #allocation4 [shape = 'u8[512]{0}', space=vmem, size = 0x400, scoped, tag = 'output window, operand 1, single buffered']
    #allocation5 [shape = 's32[1]{0}', space=sflag, size = 0x4, scoped, tag = 'scoped memory for tpu_custom_call.1']
    %12 = vsyncpa [#allocation3], 0
    %13 = vsyncpa [#allocation5], 0
    // Predicated region
    $region2: #{tpu_custom_call.1} parent=1 // pred_check
      _
    $region3: #{tpu_custom_call.1} parent=1 // pred_check_branch
      %15 = sbr.rel (0) target = $region5
    $region4: #{tpu_custom_call.1} parent=1 // pred_region
      _
    $region5: #{tpu_custom_call.1} parent=1 // pred_fallthru
      _
    // Predicated region
    $region6: #{tpu_custom_call.1} parent=1 // pred_check
      _
    $region7: #{tpu_custom_call.1} parent=1 // pred_check_branch
      %17 = sbr.rel (0) target = $region9
    $region8: #{tpu_custom_call.1} parent=1 // pred_region
      _
    $region9: #{tpu_custom_call.1} parent=1 // pred_fallthru
      _
    // Predicated region
    $region10: #{tpu_custom_call.1} parent=1 // pred_check
      _
    $region11: #{tpu_custom_call.1} parent=1 // pred_check_branch
      %19 = sbr.rel (0) target = $region13
    $region12: #{tpu_custom_call.1} parent=1 // pred_region
      _
    $region13: #{tpu_custom_call.1} parent=1 // pred_fallthru
      _
    // Predicated region
    $region14: #{tpu_custom_call.1} parent=1 // pred_check
      _
    $region15: #{tpu_custom_call.1} parent=1 // pred_check_branch
      %21 = sbr.rel (0) target = $region17
    $region16: #{tpu_custom_call.1} parent=1 // pred_region
      _
    $region17: #{tpu_custom_call.1} parent=1 // pred_fallthru
      _
    // Predicated region
    $region18: #{tpu_custom_call.1} parent=1 // pred_check
      _
    $region19: #{tpu_custom_call.1} parent=1 // pred_check_branch
      %23 = sbr.rel (0) target = $region21
    $region20: #{tpu_custom_call.1} parent=1 // pred_region
      _
    $region21: #{tpu_custom_call.1} parent=1 // pred_fallthru
      _
    %p24 = scmp.eq.s32.totalorder 0, 0
    // Predicated region
    $region22: #{tpu_custom_call.1} parent=1 // pred_check
      %p25 = pneg %p24
    $region23: #{tpu_custom_call.1} parent=1 // pred_check_branch
      %27 = sbr.rel (%p25) target = $region25
    $region24: #{tpu_custom_call.1} parent=1 // pred_region
      %vm28 = vcmask 24576
      %29 = vst.msk [vmem:[#allocation2] sm:$0x1] %vm28, 0.0
      %vm30 = vcmask 0
      %31 = vst.msk [vmem:[#allocation4] sm:$0x1] %vm30, 0.0
    $region25: #{tpu_custom_call.1} parent=1 // pred_fallthru
      _
    %v32 = vlaneseq
    %v33 = vshrl.u32 %v32, 7
    %s34 = smul.u32 0, 8
    %v35 = vstv %s34
    %v36 = vadd.s32 %v33, %v35
    %vm37 = vcmp.lt.s32.totalorder %v36, 8
    %v38 = vld [vmem:[%s0] sm:$0xff]
    %v39 = vld [vmem:[%s1] sm:$0xff]
    %v40 = vlaneseq
    %v41 = vand.u32 %v40, 127
    %vm42 = vcmask 130048
    %v43 = vsel %vm42, %v39, -inf
    %44 = vmax.xlane.f32.xlu0 %v43
    %v45 = vpop.xlane.xlu0 %44
    %v46 = vsub.f32 %v39, %v45
    %v47 = vmul.f32 %v46, 1.442695
    %v48 = vpow.pop %v47
    %v49 = vsel %vm42, %v48, 0.0
    %50 = vadd.xlane.f32.xlu0 %v49
    %v51 = vpop.xlane.xlu0 %50
    %v52 = vlog2.pop %v51
    %v53 = vmul.f32 %v52, 0.6931472
    %v54 = vadd.f32 %v45, %v53
    %55 = vset.pattern.permute.xlu0 0
    %56 = vperm.xlu0 %55, %v38
    %v57 = vpop.permute.xlu0 %56
    %vm58 = vcmp.eq.s32.totalorder %v41, %v57
    %v59 = vsel %vm58, %v39, 0.0
    %v60 = vsel %vm42, %v59, 0.0
    %61 = vadd.xlane.f32.xlu0 %v60
    %v62 = vpop.xlane.xlu0 %61
    %v63 = vsub.f32 %v54, %v62
    %v64 = vsel %vm37, %v63, 0.0
    %vm65 = vcmask 7168
    %v66 = vsel %vm65, %v64, 0.0
    %67 = vadd.xlane.f32.xlu0 %v66
    %v68 = vpop.xlane.xlu0 %67
    %v69 = vrot.slane %v68, 4
    %v70 = vadd.f32 %v68, %v69
    %v71 = vrot.slane %v70, 2
    %v72 = vadd.f32 %v70, %v71
    %v73 = vrot.slane %v72, 1
    %v74 = vadd.f32 %v72, %v73
    %s75 = vtos %v74
    %vm76 = vcmp.ge.f32.partialorder %v39, %v45
    %v77 = vsel %vm76, %v41, 16
    %v78 = vsel %vm42, %v77, 2147483647
    %v79 = vand.u32 %v78, 65535
    %v80 = vshra.s32 %v78, 16
    %v81 = vcvt.s32.f32 %v79
    %v82 = vcvt.s32.f32 %v80
    %83 = vmin.xlane.f32.xlu0 %v82
    %v84 = vpop.xlane.xlu0 %83
    %vm85 = vcmp.eq.f32.partialorder %v82, %v84
    %v86 = vsel %vm85, %v81, inf
    %87 = vmin.xlane.f32.xlu0 %v86
    %v88 = vpop.xlane.xlu0 %87
    %v89 = vcvt.f32.s32 %v88
    %v90 = vcvt.f32.s32 %v84
    %v91 = vshll.u32 %v90, 16
    %v92 = vadd.s32 %v91, %v89
    %vm93 = vcmp.eq.s32.totalorder %v92, %v38
    %vm94 = vmand %vm37, %vm93
    %v95 = vsel %vm94, 1.0, 0.0
    %v96 = vld [vmem:[#allocation4] sm:$0x1]
    %v97 = vsel %vm65, %v95, 0.0
    %98 = vadd.xlane.f32.xlu0 %v97
    %v99 = vpop.xlane.xlu0 %98
    %v100 = vrot.slane %v99, 4
    %v101 = vadd.f32 %v99, %v100
    %v102 = vrot.slane %v101, 2
    %v103 = vadd.f32 %v101, %v102
    %v104 = vrot.slane %v103, 1
    %v105 = vadd.f32 %v103, %v104
    %s106 = vtos %v105
    %v107 = vstv %s106
    %v108 = vadd.f32 %v96, %v107
    %vm109 = vcmask 0
    %110 = vst.msk [vmem:[#allocation4] sm:$0x1] %vm109, %v108
    %v111 = vld [vmem:[%s2] sm:$0xff]
    %vm112 = vcmask 15360
    %v113 = vsel %vm112, %v111, -inf
    %114 = vmax.xlane.f32.xlu0 %v113
    %v115 = vpop.xlane.xlu0 %114
    %v116 = vsub.f32 %v111, %v115
    %v117 = vmul.f32 %v116, 1.442695
    %v118 = vpow.pop %v117
    %v119 = vsel %vm112, %v118, 0.0
    %120 = vadd.xlane.f32.xlu0 %v119
    %v121 = vpop.xlane.xlu0 %120
    %v122 = vlog2.pop %v121
    %v123 = vmul.f32 %v122, 0.6931472
    %v124 = vadd.f32 %v115, %v123
    %125 = vset.pattern.permute.xlu0 1
    %126 = vperm.xlu0 %125, %v38
    %v127 = vpop.permute.xlu0 %126
    %vm128 = vcmp.eq.s32.totalorder %v41, %v127
    %v129 = vsel %vm128, %v111, 0.0
    %v130 = vsel %vm112, %v129, 0.0
    %131 = vadd.xlane.f32.xlu0 %v130
    %v132 = vpop.xlane.xlu0 %131
    %v133 = vsub.f32 %v124, %v132
    %v134 = vsel %vm37, %v133, 0.0
    %v135 = vsel %vm65, %v134, 0.0
    %136 = vadd.xlane.f32.xlu0 %v135
    %v137 = vpop.xlane.xlu0 %136
    %v138 = vrot.slane %v137, 4
    %v139 = vadd.f32 %v137, %v138
    %v140 = vrot.slane %v139, 2
    %v141 = vadd.f32 %v139, %v140
    %v142 = vrot.slane %v141, 1
    %v143 = vadd.f32 %v141, %v142
    %s144 = vtos %v143
    %v145 = vld [vmem:[%s3] sm:$0xff]
    %vm146 = vcmask 31744
    %v147 = vsel %vm146, %v145, -inf
    %148 = vmax.xlane.f32.xlu0 %v147
    %v149 = vpop.xlane.xlu0 %148
    %v150 = vsub.f32 %v145, %v149
    %v151 = vmul.f32 %v150, 1.442695
    %v152 = vpow.pop %v151
    %v153 = vsel %vm146, %v152, 0.0
    %154 = vadd.xlane.f32.xlu0 %v153
    %v155 = vpop.xlane.xlu0 %154
    %v156 = vlog2.pop %v155
    %v157 = vmul.f32 %v156, 0.6931472
    %v158 = vadd.f32 %v149, %v157
    %159 = vset.pattern.permute.xlu0 2
    %160 = vperm.xlu0 %159, %v38
    %v161 = vpop.permute.xlu0 %160
    %vm162 = vcmp.eq.s32.totalorder %v41, %v161
    %v163 = vsel %vm162, %v145, 0.0
    %v164 = vsel %vm146, %v163, 0.0
    %165 = vadd.xlane.f32.xlu0 %v164
    %v166 = vpop.xlane.xlu0 %165
    %v167 = vsub.f32 %v158, %v166
    %v168 = vsel %vm37, %v167, 0.0
    %v169 = vsel %vm65, %v168, 0.0
    %170 = vadd.xlane.f32.xlu0 %v169
    %v171 = vpop.xlane.xlu0 %170
    %v172 = vrot.slane %v171, 4
    %v173 = vadd.f32 %v171, %v172
    %v174 = vrot.slane %v173, 2
    %v175 = vadd.f32 %v173, %v174
    %v176 = vrot.slane %v175, 1
    %v177 = vadd.f32 %v175, %v176
    %s178 = vtos %v177
    %v179 = vld [vmem:[%s4] sm:$0xff]
    %vm180 = vcmask 64512
    %v181 = vsel %vm180, %v179, -inf
    %182 = vmax.xlane.f32.xlu0 %v181
    %v183 = vpop.xlane.xlu0 %182
    %v184 = vsub.f32 %v179, %v183
    %v185 = vmul.f32 %v184, 1.442695
    %v186 = vpow.pop %v185
    %v187 = vsel %vm180, %v186, 0.0
    %188 = vadd.xlane.f32.xlu0 %v187
    %v189 = vpop.xlane.xlu0 %188
    %v190 = vlog2.pop %v189
    %v191 = vmul.f32 %v190, 0.6931472
    %v192 = vadd.f32 %v183, %v191
    %193 = vset.pattern.permute.xlu0 3
    %194 = vperm.xlu0 %193, %v38
    %v195 = vpop.permute.xlu0 %194
    %vm196 = vcmp.eq.s32.totalorder %v41, %v195
    %v197 = vsel %vm196, %v179, 0.0
    %v198 = vsel %vm180, %v197, 0.0
    %199 = vadd.xlane.f32.xlu0 %v198
    %v200 = vpop.xlane.xlu0 %199
    %v201 = vsub.f32 %v192, %v200
    %v202 = vsel %vm37, %v201, 0.0
    %v203 = vsel %vm65, %v202, 0.0
    %204 = vadd.xlane.f32.xlu0 %v203
    %v205 = vpop.xlane.xlu0 %204
    %v206 = vrot.slane %v205, 4
    %v207 = vadd.f32 %v205, %v206
    %v208 = vrot.slane %v207, 2
    %v209 = vadd.f32 %v207, %v208
    %v210 = vrot.slane %v209, 1
    %v211 = vadd.f32 %v209, %v210
    %s212 = vtos %v211
    %v213 = vld [vmem:[#allocation2] sm:$0x1]
    %v214 = vstv %s75
    %v215 = vstv %s144
    %v216 = vstv %s178
    %v217 = vstv %s212
    %v218 = vlaneseq
    %vm219 = vcmp.ge.s32.totalorder %v218, 0
    %vm220 = vcmp.lt.s32.totalorder %v218, 1
    %vm221 = vmand %vm219, %vm220
    %v222 = vsel %vm221, %v214, %v215
    %vm223 = vcmp.lt.s32.totalorder %v218, 2
    %vm224 = vmand %vm219, %vm223
    %v225 = vsel %vm224, %v222, %v216
    %vm226 = vcmp.lt.s32.totalorder %v218, 3
    %vm227 = vmand %vm219, %vm226
    %v228 = vsel %vm227, %v225, %v217
    %v229 = vadd.f32 %v213, %v228
    %vm230 = vcmask 24576
    %231 = vst.msk [vmem:[#allocation2] sm:$0x1] %vm230, %v229
    // Predicated region
    $region26: #{tpu_custom_call.1} parent=1 // pred_check
      %p232 = pneg %p24
    $region27: #{tpu_custom_call.1} parent=1 // pred_check_branch
      %234 = sbr.rel (%p232) target = $region29
    $region28: #{tpu_custom_call.1} parent=1 // pred_region
      %v235 = vld [vmem:[#allocation2] sm:$0x1]
      %v236 = vmul.f32 %v235, 0.125
      %237 = vst.msk [vmem:[#allocation2] sm:$0x1] %vm230, %v236
      %v238 = vld [vmem:[#allocation4] sm:$0x1]
      %v239 = vmul.f32 %v238, 0.125
      %240 = vst.msk [vmem:[#allocation4] sm:$0x1] %vm109, %v239
    $region29: #{tpu_custom_call.1} parent=1 // pred_fallthru
      _
    // Predicated region
    $region30: #{tpu_custom_call.1} parent=1 // pred_check
      _
    $region31: #{tpu_custom_call.1} parent=1 // pred_check_branch
      %242 = sbr.rel (0) target = $region33
    $region32: #{tpu_custom_call.1} parent=1 // pred_region
      %244 = vsyncadd [#allocation3], 0
      %s246 = sshll.u32 [#allocation2], 4
      %s247 = int_to_ptr.vmem [resolvable:$true] %s246
      %s248 = sshll.u32 %s5, 4
      %s249 = int_to_ptr.hbm [resolvable:$true] %s248
      %251 = dma.vmem_to_hbm [thread:$0]  %s247, 16, %s249, [#allocation3]
    $region33: #{tpu_custom_call.1} parent=1 // pred_fallthru
      _
    // Predicated region
    $region34: #{tpu_custom_call.1} parent=1 // pred_check
      _
    $region35: #{tpu_custom_call.1} parent=1 // pred_check_branch
      %253 = sbr.rel (0) target = $region37
    $region36: #{tpu_custom_call.1} parent=1 // pred_region
      %255 = vsyncadd [#allocation5], 0
      %s257 = sshll.u32 [#allocation4], 4
      %s258 = int_to_ptr.vmem [resolvable:$true] %s257
      %s259 = sshll.u32 %s6, 4
      %s260 = int_to_ptr.hbm [resolvable:$true] %s259
      %262 = dma.vmem_to_hbm [thread:$0]  %s258, 16, %s260, [#allocation5]
    $region37: #{tpu_custom_call.1} parent=1 // pred_fallthru
      _
    // Predicated region
    $region38: #{tpu_custom_call.1} parent=1 // pred_check
      _
    $region39: #{tpu_custom_call.1} parent=1 // pred_check_branch
      %264 = sbr.rel (0) target = $region41
    $region40: #{tpu_custom_call.1} parent=1 // pred_region
      %266 = dma.done [#allocation3], 16
    $region41: #{tpu_custom_call.1} parent=1 // pred_fallthru
      _
    // Predicated region
    $region42: #{tpu_custom_call.1} parent=1 // pred_check
      _
    $region43: #{tpu_custom_call.1} parent=1 // pred_check_branch
      %268 = sbr.rel (0) target = $region45
    $region44: #{tpu_custom_call.1} parent=1 // pred_region
      %270 = dma.done [#allocation5], 16
    $region45: #{tpu_custom_call.1} parent=1 // pred_fallthru
      _
    %271 = vsyncpa [#allocation3], 1
    %272 = vsyncpa [#allocation5], 1

</llo_original>
